<compile_context>
chip_gen: v7x
topology: tpu7x:2x2x1
jax: 0.10.0
libtpu: 0.0.40
codegen_flags: <defaults>
</compile_context>

<pallas_src>
import functools

import jax
import jax.numpy as jnp
from jax import lax
from jax.experimental import pallas as pl
from jax.experimental.pallas import tpu as pltpu

_LANE = 128


def _round_up(x, m):
    return ((x + m - 1) // m) * m


# ---------------- fused Pallas kernel (all blocks + fc) ---------------------------


def _make_fused_kernel(n_layers, n_hidden, inv_k):
    """Kernel body with the (static) layer loop unrolled inside it."""

    def kernel(*refs):
        # ref order: x, [counts_i, w_i^T(pad), b_i(pad)] * n_layers, fc_w^T(pad),
        #            fc_b(pad), out
        x_ref = refs[0]
        layer_refs = refs[1:1 + 3 * n_layers]
        fcwt_ref, fcb_ref, o_ref = refs[1 + 3 * n_layers:]

        h = x_ref[...]  # bf16 (src0, 128-padded feats); stays in VMEM/vregs
        for i in range(n_layers):
            a_ref = layer_refs[3 * i]        # integer neighbor counts (bf16-exact)
            wt_ref = layer_refs[3 * i + 1]   # (in_pad, out_pad) bf16
            b_ref = layer_refs[3 * i + 2]    # (1, out_pad) f32

            # mailbox mean == counts @ h on the MXU, 1/K applied in f32 epilogue.
            m = jnp.dot(a_ref[...], h, preferred_element_type=jnp.float32) * inv_k[i]
            # NodeUpdate linear (bf16 MXU operands, f32 accumulate + f32 epilogue).
            z = (jnp.dot(m.astype(jnp.bfloat16), wt_ref[...],
                         preferred_element_type=jnp.float32) + b_ref[...])
            if i == n_layers - 1:
                # concat=True layer: cat((z, relu(z)), dim=1) realised via the
                # duplicated weight [W^T | W^T] (one lane-dense matmul) plus a
                # per-lane select -- no cross-lane concatenate.
                lane = lax.broadcasted_iota(jnp.int32, z.shape, 1)
                h = jnp.where(lane >= n_hidden, jnp.maximum(z, 0.0), z)
            else:
                h = jnp.maximum(z, 0.0)
            h = h.astype(jnp.bfloat16)

        # fc: output padded to 128 lanes -> single unmasked store.
        o_ref[...] = (jnp.dot(h, fcwt_ref[...], preferred_element_type=jnp.float32)
                      + fcb_ref[...])

    return kernel


# ---------------- one-time parameter / input layout prep --------------------------


def prepare_params(params, n_layers, in_feats, n_hidden, n_classes):
    """Transpose, zero-pad every dim to 128 lanes, bf16-cast weights (exact zeros)."""
    in_pad = _round_up(max(in_feats, _LANE), _LANE)
    hid_pad = _round_up(max(n_hidden, _LANE), _LANE)
    cat_pad = _round_up(max(2 * n_hidden, _LANE), _LANE)
    cls_pad = _round_up(max(n_classes, _LANE), _LANE)

    prepped = {}
    for i in range(n_layers):
        w = params[f"layer{i}_w"]           # (n_hidden, in_i)
        b = params[f"layer{i}_b"]           # (n_hidden,)
        in_i = w.shape[1]
        ipad = in_pad if i == 0 else hid_pad
        if i == n_layers - 1:
            # concat layer: duplicated columns -> z2[:, :H] == z2[:, H:2H] == z
            wt = jnp.zeros((ipad, cat_pad), jnp.float32)
            wt = wt.at[:in_i, :n_hidden].set(w.T)
            wt = wt.at[:in_i, n_hidden:2 * n_hidden].set(w.T)
            bb = jnp.zeros((1, cat_pad), jnp.float32)
            bb = bb.at[0, :n_hidden].set(b)
            bb = bb.at[0, n_hidden:2 * n_hidden].set(b)
        else:
            wt = jnp.zeros((ipad, hid_pad), jnp.float32).at[:in_i, :n_hidden].set(w.T)
            bb = jnp.zeros((1, hid_pad), jnp.float32).at[0, :n_hidden].set(b)
        prepped[f"layer{i}_wt"] = wt.astype(jnp.bfloat16)
        prepped[f"layer{i}_b"] = bb

    fc_w, fc_b = params["fc_w"], params["fc_b"]      # (n_classes, 2H), (n_classes,)
    fcwt = jnp.zeros((cat_pad, cls_pad), jnp.float32)
    fcwt = fcwt.at[:2 * n_hidden, :n_classes].set(fc_w.T)
    fcb = jnp.zeros((1, cls_pad), jnp.float32).at[0, :n_classes].set(fc_b)
    prepped["fc_wt"] = fcwt.astype(jnp.bfloat16)
    prepped["fc_b"] = fcb
    return prepped


def prepare_inputs(node_features, adj_counts, in_feats):
    """Pad features to 128 lanes and cast everything to bf16 ONCE (outside the jit).

    adj_counts are integer-valued (<= K), so they are exact in bf16.
    """
    in_pad = _round_up(max(in_feats, _LANE), _LANE)
    b, s0, f = node_features.shape
    x = jnp.zeros((b, s0, in_pad), jnp.float32).at[:, :, :f].set(node_features)
    x = x.astype(jnp.bfloat16)
    adjs = tuple(a.astype(jnp.bfloat16) for a in adj_counts)
    return x, adjs


# ---------------- jitted fused forward --------------------------------------------


@functools.partial(jax.jit, static_argnames=("n_hidden", "n_classes", "inv_k"))
def minibatch_gcn_train_forward(x_pad, adjs, prepped, *, n_hidden, n_classes, inv_k):
    # dropout=0.0 -> self.dropout is None in the PyTorch module (nothing to apply).
    # TODO(synk): nonzero training-mode dropout (random mask) not reproduced here.
    n_layers = len(adjs)
    batch, s0, f_pad = x_pad.shape
    num_dst = adjs[-1].shape[1]
    cls_pad = prepped["fc_wt"].shape[1]

    inputs = [x_pad]
    in_specs = [pl.BlockSpec((None, s0, f_pad), lambda b: (b, 0, 0))]
    for i in range(n_layers):
        a = adjs[i]
        wt = prepped[f"layer{i}_wt"]
        bb = prepped[f"layer{i}_b"]
        inputs += [a, wt, bb]
        in_specs += [
            pl.BlockSpec((None,) + a.shape[1:], lambda b: (b, 0, 0)),
            # weights/biases: constant block index -> resident in VMEM across the grid
            pl.BlockSpec(wt.shape, lambda b: (0, 0)),
            pl.BlockSpec(bb.shape, lambda b: (0, 0)),
        ]
    inputs += [prepped["fc_wt"], prepped["fc_b"]]
    in_specs += [pl.BlockSpec(prepped["fc_wt"].shape, lambda b: (0, 0)),
                 pl.BlockSpec(prepped["fc_b"].shape, lambda b: (0, 0))]

    # TODO(synk): at production NodeFlow sizes, swap the dense count-matrix matmul for
    # a scalar-prefetched (dst, K) gather (PrefetchScalarGridSpec + pl.Element row
    # gather), tile dst rows, and size tiles per generation (v7x: 64 MiB VMEM).
    out_pad = pl.pallas_call(
        _make_fused_kernel(n_layers, n_hidden, inv_k),
        out_shape=jax.ShapeDtypeStruct((batch, num_dst, cls_pad), jnp.float32),
        grid=(batch,),
        in_specs=in_specs,
        out_specs=pl.BlockSpec((None, num_dst, cls_pad), lambda b: (b, 0, 0)),
        compiler_params=pltpu.CompilerParams(dimension_semantics=("parallel",)),
    )(*inputs)
    return out_pad[:, :, :n_classes]


# ---------------- pure-JAX references ----------------------------------------------


def reference_forward_bf16(node_features, adj_counts, params, inv_k):
    """Mirrors the kernel's bf16-in / f32-acc math (unpadded)."""
    h = node_features.astype(jnp.bfloat16)
    n_layers = len(adj_counts)
    for i in range(n_layers):
        m = jnp.dot(adj_counts[i].astype(jnp.bfloat16), h,
                    preferred_element_type=jnp.float32) * inv_k[i]
        z = (jnp.dot(m.astype(jnp.bfloat16),
                     params[f"layer{i}_w"].T.astype(jnp.bfloat16),
                     preferred_element_type=jnp.float32)
             + params[f"layer{i}_b"])
        if i == n_layers - 1:
            h = jnp.concatenate([z, jnp.maximum(z, 0.0)], axis=1)
        else:
            h = jnp.maximum(z, 0.0)
        h = h.astype(jnp.bfloat16)
    return (jnp.dot(h, params["fc_w"].T.astype(jnp.bfloat16),
                    preferred_element_type=jnp.float32)
            + params["fc_b"])


def reference_forward_f32(node_features, adj_counts, params, inv_k):
    h = node_features
    n_layers = len(adj_counts)
    for i in range(n_layers):
        h = (adj_counts[i] @ h) * inv_k[i]
        z = h @ params[f"layer{i}_w"].T + params[f"layer{i}_b"]
        if i == n_layers - 1:
            h = jnp.concatenate([z, jax.nn.relu(z)], axis=1)
        else:
            h = jax.nn.relu(z)
    return h @ params["fc_w"].T + params["fc_b"]


# ---------------- setup -------------------------------------------------------------


def neighbor_counts(key, num_dst, num_src, k):
    """Dense integer count matrix: counts[d, s] = #times src s was sampled for dst d.
    (counts @ h) / k == mailbox['m'].mean(dim=1) with K sampled neighbors."""
    idx = jax.random.randint(key, (num_dst, k), 0, num_src)
    onehot = jax.nn.one_hot(idx, num_src, dtype=jnp.float32)  # (dst, k, src)
    return onehot.sum(axis=1)


if __name__ == "__main__":
    # Module hyperparameters (small, deterministic).
    in_feats, n_hidden, n_classes, n_layers = 32, 64, 8, 2
    # NodeFlow: layer sizes 64 -> 32 -> 16 seed nodes, fan-out K=4 per block.
    layer_sizes = [64, 32, 16]
    K = 4
    B = 2  # batch of NodeFlows processed per pallas_call (grid axis, "parallel")

    key = jax.random.PRNGKey(0)
    keys = jax.random.split(key, 32)

    node_features = jax.random.normal(
        keys[0], (B, layer_sizes[0], in_feats), jnp.float32)
    adj_counts = [
        jnp.stack([
            neighbor_counts(keys[1 + b * n_layers + i],
                            layer_sizes[i + 1], layer_sizes[i], K)
            for b in range(B)
        ])
        for i in range(n_layers)
    ]
    inv_k = tuple(1.0 / K for _ in range(n_layers))

    # Deterministic parameter init (nn.Linear shapes: W is (out, in), b is (out,)).
    def init_linear(kw, kb, out_f, in_f):
        s = 1.0 / (in_f ** 0.5)
        w = jax.random.uniform(kw, (out_f, in_f), jnp.float32, -s, s)
        b = jax.random.uniform(kb, (out_f,), jnp.float32, -s, s)
        return w, b

    params = {}
    params["layer0_w"], params["layer0_b"] = init_linear(keys[10], keys[11],
                                                         n_hidden, in_feats)
    params["layer1_w"], params["layer1_b"] = init_linear(keys[12], keys[13],
                                                         n_hidden, n_hidden)
    params["fc_w"], params["fc_b"] = init_linear(keys[14], keys[15],
                                                 n_classes, 2 * n_hidden)

    # One-time layout prep (padding + bf16 casts happen OUTSIDE the jitted forward).
    prepped = prepare_params(params, n_layers, in_feats, n_hidden, n_classes)
    x_pad, adjs_bf16 = prepare_inputs(node_features, adj_counts, in_feats)

    out = minibatch_gcn_train_forward(
        x_pad, adjs_bf16, prepped,
        n_hidden=n_hidden, n_classes=n_classes, inv_k=inv_k)
    out = jax.block_until_ready(out)
    assert out.shape == (B, layer_sizes[-1], n_classes), out.shape

    for b in range(B):
        feats_b = node_features[b]
        counts_b = [a[b] for a in adj_counts]
        ref_bf16 = reference_forward_bf16(feats_b, counts_b, params, inv_k)
        ref_f32 = reference_forward_f32(feats_b, counts_b, params, inv_k)
        assert jnp.allclose(out[b], ref_bf16, atol=2e-3, rtol=2e-3), \
            f"batch {b}: mismatch vs bf16 reference"
        assert jnp.allclose(out[b], ref_f32, atol=1e-1, rtol=1e-1), \
            f"batch {b}: mismatch vs f32 reference"

    print("KERNEL_OK")
</pallas_src>

<mosaic_0001>
module attributes {stable_mosaic.version = 11 : i64} {
  func.func @kernel(%arg0: i32, %arg1: memref<1x64x128xbf16, #tpu.memory_space<vmem>>, %arg2: memref<1x32x64xbf16, #tpu.memory_space<vmem>>, %arg3: memref<128x128xbf16, #tpu.memory_space<vmem>>, %arg4: memref<1x128xf32, #tpu.memory_space<vmem>>, %arg5: memref<1x16x32xbf16, #tpu.memory_space<vmem>>, %arg6: memref<128x128xbf16, #tpu.memory_space<vmem>>, %arg7: memref<1x128xf32, #tpu.memory_space<vmem>>, %arg8: memref<128x128xbf16, #tpu.memory_space<vmem>>, %arg9: memref<1x128xf32, #tpu.memory_space<vmem>>, %arg10: memref<1x16x128xf32, #tpu.memory_space<vmem>>) attributes {dimension_semantics = [#tpu.dimension_semantics<parallel>], iteration_bounds = array<i64: 2>, scalar_prefetch = 0 : i64, scratch_operands = 0 : i64, tpu.core_type = #tpu.core_type<tc>, window_params = [{transform_indices = @transform_0, window_bounds = array<i64: 1, 64, 128>}, {transform_indices = @transform_1, window_bounds = array<i64: 1, 32, 64>}, {pipeline_mode = #tpu.pipeline_mode<synchronous>, transform_indices = @transform_2, window_bounds = array<i64: 128, 128>}, {pipeline_mode = #tpu.pipeline_mode<synchronous>, transform_indices = @transform_3, window_bounds = array<i64: 1, 128>}, {transform_indices = @transform_4, window_bounds = array<i64: 1, 16, 32>}, {pipeline_mode = #tpu.pipeline_mode<synchronous>, transform_indices = @transform_5, window_bounds = array<i64: 128, 128>}, {pipeline_mode = #tpu.pipeline_mode<synchronous>, transform_indices = @transform_6, window_bounds = array<i64: 1, 128>}, {pipeline_mode = #tpu.pipeline_mode<synchronous>, transform_indices = @transform_7, window_bounds = array<i64: 128, 128>}, {pipeline_mode = #tpu.pipeline_mode<synchronous>, transform_indices = @transform_8, window_bounds = array<i64: 1, 128>}, {transform_indices = @transform_9, window_bounds = array<i64: 1, 16, 128>}]} {
    %c0 = arith.constant 0 : index
    %c0_0 = arith.constant 0 : index
    %c0_1 = arith.constant 0 : index
    %0 = vector.load %arg1[%c0, %c0_0, %c0_1] : memref<1x64x128xbf16, #tpu.memory_space<vmem>>, vector<1x64x128xbf16>
    %1 = vector.shape_cast %0 : vector<1x64x128xbf16> to vector<64x128xbf16>
    %c0_2 = arith.constant 0 : index
    %c0_3 = arith.constant 0 : index
    %c0_4 = arith.constant 0 : index
    %2 = vector.load %arg2[%c0_2, %c0_3, %c0_4] : memref<1x32x64xbf16, #tpu.memory_space<vmem>>, vector<1x32x64xbf16>
    %3 = vector.shape_cast %2 : vector<1x32x64xbf16> to vector<32x64xbf16>
    %cst = arith.constant dense<0.000000e+00> : vector<32x128xf32>
    %4 = tpu.matmul %3, %1, %cst {dimension_numbers = #tpu.dot_dimension_numbers<[1], [0], [0], [1], [0, 0, 1, 1], [], []>} : vector<32x64xbf16>, vector<64x128xbf16>, vector<32x128xf32> -> vector<32x128xf32>
    %cst_5 = arith.constant 2.500000e-01 : f32
    %5 = vector.broadcast %cst_5 : f32 to vector<32x128xf32>
    %6 = arith.mulf %4, %5 : vector<32x128xf32>
    %7 = arith.truncf %6 : vector<32x128xf32> to vector<32x128xbf16>
    %c0_6 = arith.constant 0 : index
    %c0_7 = arith.constant 0 : index
    %8 = vector.load %arg3[%c0_6, %c0_7] : memref<128x128xbf16, #tpu.memory_space<vmem>>, vector<128x128xbf16>
    %cst_8 = arith.constant dense<0.000000e+00> : vector<32x128xf32>
    %9 = tpu.matmul %7, %8, %cst_8 {dimension_numbers = #tpu.dot_dimension_numbers<[1], [0], [0], [1], [0, 0, 1, 1], [], []>} : vector<32x128xbf16>, vector<128x128xbf16>, vector<32x128xf32> -> vector<32x128xf32>
    %c0_9 = arith.constant 0 : index
    %c0_10 = arith.constant 0 : index
    %10 = vector.load %arg4[%c0_9, %c0_10] : memref<1x128xf32, #tpu.memory_space<vmem>>, vector<1x128xf32>
    %11 = vector.broadcast %10 : vector<1x128xf32> to vector<32x128xf32>
    %12 = arith.addf %9, %11 : vector<32x128xf32>
    %cst_11 = arith.constant 0.000000e+00 : f32
    %13 = vector.broadcast %cst_11 : f32 to vector<32x128xf32>
    %14 = arith.maximumf %12, %13 : vector<32x128xf32>
    %15 = arith.truncf %14 : vector<32x128xf32> to vector<32x128xbf16>
    %c0_12 = arith.constant 0 : index
    %c0_13 = arith.constant 0 : index
    %c0_14 = arith.constant 0 : index
    %16 = vector.load %arg5[%c0_12, %c0_13, %c0_14] : memref<1x16x32xbf16, #tpu.memory_space<vmem>>, vector<1x16x32xbf16>
    %17 = vector.shape_cast %16 : vector<1x16x32xbf16> to vector<16x32xbf16>
    %cst_15 = arith.constant dense<0.000000e+00> : vector<16x128xf32>
    %18 = tpu.matmul %17, %15, %cst_15 {dimension_numbers = #tpu.dot_dimension_numbers<[1], [0], [0], [1], [0, 0, 1, 1], [], []>} : vector<16x32xbf16>, vector<32x128xbf16>, vector<16x128xf32> -> vector<16x128xf32>
    %cst_16 = arith.constant 2.500000e-01 : f32
    %19 = vector.broadcast %cst_16 : f32 to vector<16x128xf32>
    %20 = arith.mulf %18, %19 : vector<16x128xf32>
    %21 = arith.truncf %20 : vector<16x128xf32> to vector<16x128xbf16>
    %c0_17 = arith.constant 0 : index
    %c0_18 = arith.constant 0 : index
    %22 = vector.load %arg6[%c0_17, %c0_18] : memref<128x128xbf16, #tpu.memory_space<vmem>>, vector<128x128xbf16>
    %cst_19 = arith.constant dense<0.000000e+00> : vector<16x128xf32>
    %23 = tpu.matmul %21, %22, %cst_19 {dimension_numbers = #tpu.dot_dimension_numbers<[1], [0], [0], [1], [0, 0, 1, 1], [], []>} : vector<16x128xbf16>, vector<128x128xbf16>, vector<16x128xf32> -> vector<16x128xf32>
    %c0_20 = arith.constant 0 : index
    %c0_21 = arith.constant 0 : index
    %24 = vector.load %arg7[%c0_20, %c0_21] : memref<1x128xf32, #tpu.memory_space<vmem>>, vector<1x128xf32>
    %25 = vector.broadcast %24 : vector<1x128xf32> to vector<16x128xf32>
    %26 = arith.addf %23, %25 : vector<16x128xf32>
    %27 = tpu.iota {dimensions = array<i32: 1>} : vector<16x128xi32>
    %c64_i32 = arith.constant 64 : i32
    %28 = vector.broadcast %c64_i32 : i32 to vector<16x128xi32>
    %29 = arith.cmpi sge, %27, %28 : vector<16x128xi32>
    %cst_22 = arith.constant 0.000000e+00 : f32
    %30 = vector.broadcast %cst_22 : f32 to vector<16x128xf32>
    %31 = arith.maximumf %26, %30 : vector<16x128xf32>
    %32 = arith.select %29, %31, %26 : vector<16x128xi1>, vector<16x128xf32>
    %33 = arith.truncf %32 : vector<16x128xf32> to vector<16x128xbf16>
    %c0_23 = arith.constant 0 : index
    %c0_24 = arith.constant 0 : index
    %34 = vector.load %arg8[%c0_23, %c0_24] : memref<128x128xbf16, #tpu.memory_space<vmem>>, vector<128x128xbf16>
    %cst_25 = arith.constant dense<0.000000e+00> : vector<16x128xf32>
    %35 = tpu.matmul %33, %34, %cst_25 {dimension_numbers = #tpu.dot_dimension_numbers<[1], [0], [0], [1], [0, 0, 1, 1], [], []>} : vector<16x128xbf16>, vector<128x128xbf16>, vector<16x128xf32> -> vector<16x128xf32>
    %c0_26 = arith.constant 0 : index
    %c0_27 = arith.constant 0 : index
    %36 = vector.load %arg9[%c0_26, %c0_27] : memref<1x128xf32, #tpu.memory_space<vmem>>, vector<1x128xf32>
    %37 = vector.broadcast %36 : vector<1x128xf32> to vector<16x128xf32>
    %38 = arith.addf %35, %37 : vector<16x128xf32>
    %c0_28 = arith.constant 0 : index
    %c0_29 = arith.constant 0 : index
    %c0_30 = arith.constant 0 : index
    %39 = vector.load %arg10[%c0_28, %c0_29, %c0_30] : memref<1x16x128xf32, #tpu.memory_space<vmem>>, vector<1x16x128xf32>
    %40 = vector.shape_cast %39 : vector<1x16x128xf32> to vector<16x128xf32>
    %41 = vector.shape_cast %38 : vector<16x128xf32> to vector<1x16x128xf32>
    tpu.vector_store %arg10[%c0_28, %c0_29, %c0_30], %41 {strides = array<i32>} : memref<1x16x128xf32, #tpu.memory_space<vmem>>, vector<1x16x128xf32>,
    return
  }
  func.func @transform_0(%arg0: i32) -> (i32, i32, i32) {
    %c0_i32 = arith.constant 0 : i32
    %c0_i32_0 = arith.constant 0 : i32
    %c0_i32_1 = arith.constant 0 : i32
    return %arg0, %c0_i32, %c0_i32_0 : i32, i32, i32
  }
  func.func @transform_1(%arg0: i32) -> (i32, i32, i32) {
    %c0_i32 = arith.constant 0 : i32
    %c0_i32_0 = arith.constant 0 : i32
    %c0_i32_1 = arith.constant 0 : i32
    return %arg0, %c0_i32, %c0_i32_0 : i32, i32, i32
  }
  func.func @transform_2(%arg0: i32) -> (i32, i32) {
    %c0_i32 = arith.constant 0 : i32
    %c0_i32_0 = arith.constant 0 : i32
    %c0_i32_1 = arith.constant 0 : i32
    return %c0_i32, %c0_i32_0 : i32, i32
  }
  func.func @transform_3(%arg0: i32) -> (i32, i32) {
    %c0_i32 = arith.constant 0 : i32
    %c0_i32_0 = arith.constant 0 : i32
    %c0_i32_1 = arith.constant 0 : i32
    return %c0_i32, %c0_i32_0 : i32, i32
  }
  func.func @transform_4(%arg0: i32) -> (i32, i32, i32) {
    %c0_i32 = arith.constant 0 : i32
    %c0_i32_0 = arith.constant 0 : i32
    %c0_i32_1 = arith.constant 0 : i32
    return %arg0, %c0_i32, %c0_i32_0 : i32, i32, i32
  }
  func.func @transform_5(%arg0: i32) -> (i32, i32) {
    %c0_i32 = arith.constant 0 : i32
    %c0_i32_0 = arith.constant 0 : i32
    %c0_i32_1 = arith.constant 0 : i32
    return %c0_i32, %c0_i32_0 : i32, i32
  }
  func.func @transform_6(%arg0: i32) -> (i32, i32) {
    %c0_i32 = arith.constant 0 : i32
    %c0_i32_0 = arith.constant 0 : i32
    %c0_i32_1 = arith.constant 0 : i32
    return %c0_i32, %c0_i32_0 : i32, i32
  }
  func.func @transform_7(%arg0: i32) -> (i32, i32) {
    %c0_i32 = arith.constant 0 : i32
    %c0_i32_0 = arith.constant 0 : i32
    %c0_i32_1 = arith.constant 0 : i32
    return %c0_i32, %c0_i32_0 : i32, i32
  }
  func.func @transform_8(%arg0: i32) -> (i32, i32) {
    %c0_i32 = arith.constant 0 : i32
    %c0_i32_0 = arith.constant 0 : i32
    %c0_i32_1 = arith.constant 0 : i32
    return %c0_i32, %c0_i32_0 : i32, i32
  }
  func.func @transform_9(%arg0: i32) -> (i32, i32, i32) {
    %c0_i32 = arith.constant 0 : i32
    %c0_i32_0 = arith.constant 0 : i32
    %c0_i32_1 = arith.constant 0 : i32
    return %arg0, %c0_i32, %c0_i32_0 : i32, i32, i32
  }
}

</mosaic_0001>

<llo_original>
// kernel: minibatch_gcn_train_forward.1
$region0: #{minibatch_gcn_train_forward.1}
  #allocation0 [shape = 'u32[]', space=smem, size = 0x4, offset = 0x4, fixed_abs, tag = 'smem constant byte address 0x4 - core index']
  #allocation1 [shape = 'u32[144,128]{1,0:T(1,128)}', space=vmem, size = 0x12000, scoped, tag = 'internal scratch']
  %s0 = inlined_call_operand.hbm [shape: bf16[2,64,128], index: 0, kind: input, shape index: {}]
  %s1 = inlined_call_operand.hbm [shape: bf16[2,32,64], index: 1, kind: input, shape index: {}]
  %s2 = inlined_call_operand.hbm [shape: bf16[128,128], index: 2, kind: input, shape index: {}]
  %s3 = inlined_call_operand.vmem [shape: f32[1,128], index: 3, kind: input, shape index: {}]
  %s4 = inlined_call_operand.hbm [shape: bf16[2,16,32], index: 4, kind: input, shape index: {}]
  %s5 = inlined_call_operand.hbm [shape: bf16[128,128], index: 5, kind: input, shape index: {}]
  %s6 = inlined_call_operand.vmem [shape: f32[1,128], index: 6, kind: input, shape index: {}]
  %s7 = inlined_call_operand.hbm [shape: bf16[128,128], index: 7, kind: input, shape index: {}]
  %s8 = inlined_call_operand.vmem [shape: f32[1,128], index: 8, kind: input, shape index: {}]
  %s9 = inlined_call_operand.vmem [shape: f32[2,16,128], index: 9, kind: output, shape index: {}]
  %s10 = sld [smem:[#allocation0]]
  $region93: #{minibatch_gcn_train_forward.1} parent=0
    _
  %s12 = ssub.s32 1, %s10
  %s13 = scalar_select 0, %s12, %s10
  $region1: #{minibatch_gcn_train_forward.1} parent=0
    #allocation2 [shape = 'u8[32768]{0}', space=vmem, size = 0x8000, scoped, tag = 'input window, operand 0']
    #allocation3 [shape = 's32[2]{0}', space=sflag, size = 0x8, scoped, tag = 'scoped memory for minibatch_gcn_train_forward.1']
    #allocation4 [shape = 'u8[16384]{0}', space=vmem, size = 0x4000, scoped, tag = 'input window, operand 1']
    #allocation5 [shape = 's32[2]{0}', space=sflag, size = 0x8, scoped, tag = 'scoped memory for minibatch_gcn_train_forward.1']
    #allocation6 [shape = 'u8[32768]{0}', space=vmem, size = 0x8000, scoped, tag = 'input window, operand 2, single buffered']
    #allocation7 [shape = 'u8[8192]{0}', space=vmem, size = 0x2000, scoped, tag = 'input window, operand 4']
    #allocation8 [shape = 's32[2]{0}', space=sflag, size = 0x8, scoped, tag = 'scoped memory for minibatch_gcn_train_forward.1']
    #allocation9 [shape = 'u8[32768]{0}', space=vmem, size = 0x8000, scoped, tag = 'input window, operand 5, single buffered']
    #allocation10 [shape = 'u8[32768]{0}', space=vmem, size = 0x8000, scoped, tag = 'input window, operand 7, single buffered']
    #allocation11 [shape = 's32[1]{0}', space=sflag, size = 0x4, scoped, tag = 'scoped memory for minibatch_gcn_train_forward.1']
    %14 = vsyncpa [#allocation3], 0
    %s15 = scalar_lea.sflag [#allocation3], 1
    %16 = vsyncpa %s15, 0
    %17 = vsyncpa [#allocation5], 0
    %s18 = scalar_lea.sflag [#allocation5], 1
    %19 = vsyncpa %s18, 0
    %20 = vsyncpa [#allocation8], 0
    %s21 = scalar_lea.sflag [#allocation8], 1
    %22 = vsyncpa %s21, 0
    %23 = vsyncpa [#allocation11], 0
    loop: start=0, step=1, limit=4
    $region2: #{minibatch_gcn_train_forward.1} parent=1 // loop_pre_header
      _
    $region3: #{minibatch_gcn_train_forward.1} parent=1 // loop_header
      %s25 = sphi 0, %s29
      %p26 = scmp.ge.s32.totalorder %s25, 4
      %s35 = sphi 0, %s37
      %s38 = sphi 0, %s35
      %s39 = sphi 0, %s38
      %s55 = sphi 0, %s39
      %s61 = sphi 0, %s63
      %s64 = sphi 0, %s61
      %s65 = sphi 0, %s64
      %s81 = sphi 0, %s65
      %s85 = sphi 0, %s85
      %s87 = sphi 0, %s85
      %s88 = sphi 0, %s87
      %s102 = sphi 0, %s88
      %s106 = sphi 0, %s106
      %s108 = sphi 0, %s106
      %s109 = sphi 0, %s108
      %s123 = sphi 0, %s109
      %s129 = sphi 0, %s131
      %s132 = sphi 0, %s129
      %s133 = sphi 0, %s132
      %s149 = sphi 0, %s133
      %s153 = sphi 0, %s153
      %s155 = sphi 0, %s153
      %s156 = sphi 0, %s155
      %s170 = sphi 0, %s156
      %s174 = sphi 0, %s174
      %s176 = sphi 0, %s174
      %s177 = sphi 0, %s176
      %s191 = sphi 0, %s177
      %s195 = sphi 0, %s195
      %s197 = sphi 0, %s195
      %s198 = sphi 0, %s197
      %s212 = sphi 0, %s198
      %s216 = sphi 0, %s216
      %s218 = sphi 0, %s216
      %s219 = sphi 0, %s218
      %s233 = sphi 0, %s219
      %s239 = sphi 0, %s241
      %s242 = sphi 0, %s239
      %s243 = sphi 0, %s242
      %s259 = sphi 0, %s243
    $region4: #{minibatch_gcn_train_forward.1} parent=1 // loop_header_branch
      %28 = sbr.rel (%p26) target = $region8
    $region5: #{minibatch_gcn_train_forward.1} parent=1 // loop_body
      %s30 = ssub.s32 %s25, 1
      %s31 = ssub.s32 %s25, 2
      %s32 = sadd.s32 %s25, 1
      %s33 = ssub.s32 %s25, %s32
      %p34 = scmp.eq.s32.totalorder %s33, 0
      %s36 = sadd.s32 %s35, 1
      %s37 = scalar_select %p34, %s35, %s36
      %p40 = pneg %p34
      %p41 = scmp.eq.s32.totalorder %s25, 1
      %p42 = por %p40, %p41
      %p43 = scmp.ne.s32.totalorder %s35, %s38
      %p44 = scmp.eq.s32.totalorder %s25, 0
      %p45 = por %p43, %p44
      %p46 = scmp.ne.s32.totalorder %s35, %s38
      %p47 = scmp.eq.s32.totalorder %s30, 1
      %p48 = por %p46, %p47
      %p49 = scmp.ne.s32.totalorder %s38, %s39
      %p50 = scmp.eq.s32.totalorder %s30, 0
      %p51 = por %p49, %p50
      %p52 = scmp.ne.s32.totalorder %s38, %s39
      %p53 = scmp.eq.s32.totalorder %s31, 1
      %p54 = por %p52, %p53
      %p56 = scmp.ne.s32.totalorder %s39, %s55
      %p57 = scmp.eq.s32.totalorder %s31, 0
      %p58 = por %p56, %p57
      %s59 = ssub.s32 %s25, %s32
      %p60 = scmp.eq.s32.totalorder %s59, 0
      %s62 = sadd.s32 %s61, 1
      %s63 = scalar_select %p60, %s61, %s62
      %p66 = pneg %p60
      %p67 = scmp.eq.s32.totalorder %s25, 1
      %p68 = por %p66, %p67
      %p69 = scmp.ne.s32.totalorder %s61, %s64
      %p70 = scmp.eq.s32.totalorder %s25, 0
      %p71 = por %p69, %p70
      %p72 = scmp.ne.s32.totalorder %s61, %s64
      %p73 = scmp.eq.s32.totalorder %s30, 1
      %p74 = por %p72, %p73
      %p75 = scmp.ne.s32.totalorder %s64, %s65
      %p76 = scmp.eq.s32.totalorder %s30, 0
      %p77 = por %p75, %p76
      %p78 = scmp.ne.s32.totalorder %s64, %s65
      %p79 = scmp.eq.s32.totalorder %s31, 1
      %p80 = por %p78, %p79
      %p82 = scmp.ne.s32.totalorder %s65, %s81
      %p83 = scmp.eq.s32.totalorder %s31, 0
      %p84 = por %p82, %p83
      %s86 = sadd.s32 %s85, 1
      %p89 = scmp.eq.s32.totalorder %s25, 1
      %p90 = scmp.ne.s32.totalorder %s85, %s87
      %p91 = scmp.eq.s32.totalorder %s25, 0
      %p92 = por %p90, %p91
      %p93 = scmp.ne.s32.totalorder %s85, %s87
      %p94 = scmp.eq.s32.totalorder %s30, 1
      %p95 = por %p93, %p94
      %p96 = scmp.ne.s32.totalorder %s87, %s88
      %p97 = scmp.eq.s32.totalorder %s30, 0
      %p98 = por %p96, %p97
      %p99 = scmp.ne.s32.totalorder %s87, %s88
      %p100 = scmp.eq.s32.totalorder %s31, 1
      %p101 = por %p99, %p100
      %p103 = scmp.ne.s32.totalorder %s88, %s102
      %p104 = scmp.eq.s32.totalorder %s31, 0
      %p105 = por %p103, %p104
      %s107 = sadd.s32 %s106, 1
      %p110 = scmp.eq.s32.totalorder %s25, 1
      %p111 = scmp.ne.s32.totalorder %s106, %s108
      %p112 = scmp.eq.s32.totalorder %s25, 0
      %p113 = por %p111, %p112
      %p114 = scmp.ne.s32.totalorder %s106, %s108
      %p115 = scmp.eq.s32.totalorder %s30, 1
      %p116 = por %p114, %p115
      %p117 = scmp.ne.s32.totalorder %s108, %s109
      %p118 = scmp.eq.s32.totalorder %s30, 0
      %p119 = por %p117, %p118
      %p120 = scmp.ne.s32.totalorder %s108, %s109
      %p121 = scmp.eq.s32.totalorder %s31, 1
      %p122 = por %p120, %p121
      %p124 = scmp.ne.s32.totalorder %s109, %s123
      %p125 = scmp.eq.s32.totalorder %s31, 0
      %p126 = por %p124, %p125
      %s127 = ssub.s32 %s25, %s32
      %p128 = scmp.eq.s32.totalorder %s127, 0
      %s130 = sadd.s32 %s129, 1
      %s131 = scalar_select %p128, %s129, %s130
      %p134 = pneg %p128
      %p135 = scmp.eq.s32.totalorder %s25, 1
      %p136 = por %p134, %p135
      %p137 = scmp.ne.s32.totalorder %s129, %s132
      %p138 = scmp.eq.s32.totalorder %s25, 0
      %p139 = por %p137, %p138
      %p140 = scmp.ne.s32.totalorder %s129, %s132
      %p141 = scmp.eq.s32.totalorder %s30, 1
      %p142 = por %p140, %p141
      %p143 = scmp.ne.s32.totalorder %s132, %s133
      %p144 = scmp.eq.s32.totalorder %s30, 0
      %p145 = por %p143, %p144
      %p146 = scmp.ne.s32.totalorder %s132, %s133
      %p147 = scmp.eq.s32.totalorder %s31, 1
      %p148 = por %p146, %p147
      %p150 = scmp.ne.s32.totalorder %s133, %s149
      %p151 = scmp.eq.s32.totalorder %s31, 0
      %p152 = por %p150, %p151
      %s154 = sadd.s32 %s153, 1
      %p157 = scmp.eq.s32.totalorder %s25, 1
      %p158 = scmp.ne.s32.totalorder %s153, %s155
      %p159 = scmp.eq.s32.totalorder %s25, 0
      %p160 = por %p158, %p159
      %p161 = scmp.ne.s32.totalorder %s153, %s155
      %p162 = scmp.eq.s32.totalorder %s30, 1
      %p163 = por %p161, %p162
      %p164 = scmp.ne.s32.totalorder %s155, %s156
      %p165 = scmp.eq.s32.totalorder %s30, 0
      %p166 = por %p164, %p165
      %p167 = scmp.ne.s32.totalorder %s155, %s156
      %p168 = scmp.eq.s32.totalorder %s31, 1
      %p169 = por %p167, %p168
      %p171 = scmp.ne.s32.totalorder %s156, %s170
      %p172 = scmp.eq.s32.totalorder %s31, 0
      %p173 = por %p171, %p172
      %s175 = sadd.s32 %s174, 1
      %p178 = scmp.eq.s32.totalorder %s25, 1
      %p179 = scmp.ne.s32.totalorder %s174, %s176
      %p180 = scmp.eq.s32.totalorder %s25, 0
      %p181 = por %p179, %p180
      %p182 = scmp.ne.s32.totalorder %s174, %s176
      %p183 = scmp.eq.s32.totalorder %s30, 1
      %p184 = por %p182, %p183
      %p185 = scmp.ne.s32.totalorder %s176, %s177
      %p186 = scmp.eq.s32.totalorder %s30, 0
      %p187 = por %p185, %p186
      %p188 = scmp.ne.s32.totalorder %s176, %s177
      %p189 = scmp.eq.s32.totalorder %s31, 1
      %p190 = por %p188, %p189
      %p192 = scmp.ne.s32.totalorder %s177, %s191
      %p193 = scmp.eq.s32.totalorder %s31, 0
      %p194 = por %p192, %p193
      %s196 = sadd.s32 %s195, 1
      %p199 = scmp.eq.s32.totalorder %s25, 1
      %p200 = scmp.ne.s32.totalorder %s195, %s197
      %p201 = scmp.eq.s32.totalorder %s25, 0
      %p202 = por %p200, %p201
      %p203 = scmp.ne.s32.totalorder %s195, %s197
      %p204 = scmp.eq.s32.totalorder %s30, 1
      %p205 = por %p203, %p204
      %p206 = scmp.ne.s32.totalorder %s197, %s198
      %p207 = scmp.eq.s32.totalorder %s30, 0
      %p208 = por %p206, %p207
      %p209 = scmp.ne.s32.totalorder %s197, %s198
      %p210 = scmp.eq.s32.totalorder %s31, 1
      %p211 = por %p209, %p210
      %p213 = scmp.ne.s32.totalorder %s198, %s212
      %p214 = scmp.eq.s32.totalorder %s31, 0
      %p215 = por %p213, %p214
      %s217 = sadd.s32 %s216, 1
      %p220 = scmp.eq.s32.totalorder %s25, 1
      %p221 = scmp.ne.s32.totalorder %s216, %s218
      %p222 = scmp.eq.s32.totalorder %s25, 0
      %p223 = por %p221, %p222
      %p224 = scmp.ne.s32.totalorder %s216, %s218
      %p225 = scmp.eq.s32.totalorder %s30, 1
      %p226 = por %p224, %p225
      %p227 = scmp.ne.s32.totalorder %s218, %s219
      %p228 = scmp.eq.s32.totalorder %s30, 0
      %p229 = por %p227, %p228
      %p230 = scmp.ne.s32.totalorder %s218, %s219
      %p231 = scmp.eq.s32.totalorder %s31, 1
      %p232 = por %p230, %p231
      %p234 = scmp.ne.s32.totalorder %s219, %s233
      %p235 = scmp.eq.s32.totalorder %s31, 0
      %p236 = por %p234, %p235
      %s237 = ssub.s32 %s25, %s32
      %p238 = scmp.eq.s32.totalorder %s237, 0
      %s240 = sadd.s32 %s239, 1
      %s241 = scalar_select %p238, %s239, %s240
      %p244 = pneg %p238
      %p245 = scmp.eq.s32.totalorder %s25, 1
      %p246 = por %p244, %p245
      %p247 = scmp.ne.s32.totalorder %s239, %s242
      %p248 = scmp.eq.s32.totalorder %s25, 0
      %p249 = por %p247, %p248
      %p250 = scmp.ne.s32.totalorder %s239, %s242
      %p251 = scmp.eq.s32.totalorder %s30, 1
      %p252 = por %p250, %p251
      %p253 = scmp.ne.s32.totalorder %s242, %s243
      %p254 = scmp.eq.s32.totalorder %s30, 0
      %p255 = por %p253, %p254
      %p256 = scmp.ne.s32.totalorder %s242, %s243
      %p257 = scmp.eq.s32.totalorder %s31, 1
      %p258 = por %p256, %p257
      %p260 = scmp.ne.s32.totalorder %s243, %s259
      %p261 = scmp.eq.s32.totalorder %s31, 0
      %p262 = por %p260, %p261
      %p263 = scmp.le.s32.totalorder 1, %s25
      %p264 = scmp.lt.s32.totalorder %s25, 3
      %p265 = pnand %p263, %p264
      %p266 = pneg %p265
      // Predicated region
      $region9: #{minibatch_gcn_train_forward.1} parent=5 // pred_check
        _
      $region10: #{minibatch_gcn_train_forward.1} parent=5 // pred_check_branch
        %268 = sbr.rel (%p265) target = $region12
      $region11: #{minibatch_gcn_train_forward.1} parent=5 // pred_region
        %s269 = ssub.s32 %s25, 1
        // Predicated region
        $region13: #{minibatch_gcn_train_forward.1} parent=11 // pred_check
          %p270 = pneg %p98
        $region14: #{minibatch_gcn_train_forward.1} parent=11 // pred_check_branch
          %272 = sbr.rel (%p270) target = $region16
        $region15: #{minibatch_gcn_train_forward.1} parent=11 // pred_region
          %s274 = ssub.s32 1024, 1024
          %275 = vsyncadd [#allocation5], %s274
          %s276 = sshll.u32 [#allocation6], 4
          %s277 = int_to_ptr.vmem [resolvable:$true] %s276
          %282 = dma.hbm_to_vmem [thread:$0]  %s2, 1024, %s277, [#allocation5], 64, 64, 4
        $region16: #{minibatch_gcn_train_forward.1} parent=11 // pred_fallthru
          _
        // Predicated region
        $region17: #{minibatch_gcn_train_forward.1} parent=11 // pred_check
          %p283 = pneg %p119
        $region18: #{minibatch_gcn_train_forward.1} parent=11 // pred_check_branch
          %285 = sbr.rel (%p283) target = $region20
        $region19: #{minibatch_gcn_train_forward.1} parent=11 // pred_region
          _
        $region20: #{minibatch_gcn_train_forward.1} parent=11 // pred_fallthru
          _
        // Predicated region
        $region21: #{minibatch_gcn_train_forward.1} parent=11 // pred_check
          %p286 = pneg %p166
        $region22: #{minibatch_gcn_train_forward.1} parent=11 // pred_check_branch
          %288 = sbr.rel (%p286) target = $region24
        $region23: #{minibatch_gcn_train_forward.1} parent=11 // pred_region
          %s290 = ssub.s32 1024, 1024
          %291 = vsyncadd [#allocation8], %s290
          %s292 = sshll.u32 [#allocation9], 4
          %s293 = int_to_ptr.vmem [resolvable:$true] %s292
          %298 = dma.hbm_to_vmem [thread:$0]  %s5, 1024, %s293, [#allocation8], 64, 64, 4
        $region24: #{minibatch_gcn_train_forward.1} parent=11 // pred_fallthru
          _
        // Predicated region
        $region25: #{minibatch_gcn_train_forward.1} parent=11 // pred_check
          %p299 = pneg %p187
        $region26: #{minibatch_gcn_train_forward.1} parent=11 // pred_check_branch
          %301 = sbr.rel (%p299) target = $region28
        $region27: #{minibatch_gcn_train_forward.1} parent=11 // pred_region
          _
        $region28: #{minibatch_gcn_train_forward.1} parent=11 // pred_fallthru
          _
        // Predicated region
        $region29: #{minibatch_gcn_train_forward.1} parent=11 // pred_check
          %p302 = pneg %p208
        $region30: #{minibatch_gcn_train_forward.1} parent=11 // pred_check_branch
          %304 = sbr.rel (%p302) target = $region32
        $region31: #{minibatch_gcn_train_forward.1} parent=11 // pred_region
          %s306 = ssub.s32 1024, 1024
          %307 = vsyncadd [#allocation11], %s306
          %s308 = sshll.u32 [#allocation10], 4
          %s309 = int_to_ptr.vmem [resolvable:$true] %s308
          %314 = dma.hbm_to_vmem [thread:$0]  %s7, 1024, %s309, [#allocation11], 64, 64, 4
        $region32: #{minibatch_gcn_train_forward.1} parent=11 // pred_fallthru
          _
        // Predicated region
        $region33: #{minibatch_gcn_train_forward.1} parent=11 // pred_check
          %p315 = pneg %p229
        $region34: #{minibatch_gcn_train_forward.1} parent=11 // pred_check_branch
          %317 = sbr.rel (%p315) target = $region36
        $region35: #{minibatch_gcn_train_forward.1} parent=11 // pred_region
          _
        $region36: #{minibatch_gcn_train_forward.1} parent=11 // pred_fallthru
          _
      $region12: #{minibatch_gcn_train_forward.1} parent=5 // pred_fallthru
        _
      %p318 = scmp.lt.s32.totalorder %s25, 2
      // Predicated region
      $region37: #{minibatch_gcn_train_forward.1} parent=5 // pred_check
        %p319 = pneg %p318
      $region38: #{minibatch_gcn_train_forward.1} parent=5 // pred_check_branch
        %321 = sbr.rel (%p319) target = $region40
      $region39: #{minibatch_gcn_train_forward.1} parent=5 // pred_region
        // Predicated region
        $region41: #{minibatch_gcn_train_forward.1} parent=39 // pred_check
          %p322 = pneg %p45
        $region42: #{minibatch_gcn_train_forward.1} parent=39 // pred_check_branch
          %324 = sbr.rel (%p322) target = $region44
        $region43: #{minibatch_gcn_train_forward.1} parent=39 // pred_region
          %s325 = sand.u32 %s35, 1
          %s326 = scalar_lea.sflag [#allocation3], %s325
          %s327 = sand.u32 %s35, 1
          %s328 = smul.addr %s327, 32
          %s329 = scalar_lea.vmem [#allocation2], %s328
          %s331 = ssub.s32 512, 512
          %332 = vsyncadd %s326, %s331
          %s333 = smul.addr %s25, 8
          %s334 = smul.addr %s333, 64
          %s335 = scalar_lea.hbm %s0, %s334
          %s336 = sshll.u32 %s329, 4
          %s337 = int_to_ptr.vmem [resolvable:$true] %s336
          %342 = dma.hbm_to_vmem [thread:$0]  %s335, 512, %s337, %s326, 64, 64, 4
        $region44: #{minibatch_gcn_train_forward.1} parent=39 // pred_fallthru
          _
        // Predicated region
        $region45: #{minibatch_gcn_train_forward.1} parent=39 // pred_check
          %p343 = pneg %p71
        $region46: #{minibatch_gcn_train_forward.1} parent=39 // pred_check_branch
          %345 = sbr.rel (%p343) target = $region48
        $region47: #{minibatch_gcn_train_forward.1} parent=39 // pred_region
          %s346 = sand.u32 %s25, 1
          %s347 = scalar_lea.sflag [#allocation5], %s346
          %s348 = sand.u32 %s61, 1
          %s349 = smul.addr %s348, 16
          %s350 = scalar_lea.vmem [#allocation4], %s349
          %s352 = ssub.s32 256, 256
          %353 = vsyncadd %s347, %s352
          %s354 = smul.addr %s25, 4
          %s355 = smul.addr %s354, 64
          %s356 = scalar_lea.hbm %s1, %s355
          %s357 = sshll.u32 %s350, 4
          %s358 = int_to_ptr.vmem [resolvable:$true] %s357
          %363 = dma.hbm_to_vmem [thread:$0]  %s356, 256, %s358, %s347, 64, 64, 4
        $region48: #{minibatch_gcn_train_forward.1} parent=39 // pred_fallthru
          _
        // Predicated region
        $region49: #{minibatch_gcn_train_forward.1} parent=39 // pred_check
          %p364 = pneg %p139
        $region50: #{minibatch_gcn_train_forward.1} parent=39 // pred_check_branch
          %366 = sbr.rel (%p364) target = $region52
        $region51: #{minibatch_gcn_train_forward.1} parent=39 // pred_region
          %s367 = sand.u32 %s25, 1
          %s368 = scalar_lea.sflag [#allocation8], %s367
          %s369 = sand.u32 %s129, 1
          %s370 = smul.addr %s369, 8
          %s371 = scalar_lea.vmem [#allocation7], %s370
          %s373 = ssub.s32 128, 128
          %374 = vsyncadd %s368, %s373
          %s375 = smul.addr %s25, 2
          %s376 = smul.addr %s375, 64
          %s377 = scalar_lea.hbm %s4, %s376
          %s378 = sshll.u32 %s371, 4
          %s379 = int_to_ptr.vmem [resolvable:$true] %s378
          %384 = dma.hbm_to_vmem [thread:$0]  %s377, 128, %s379, %s368, 64, 64, 4
        $region52: #{minibatch_gcn_train_forward.1} parent=39 // pred_fallthru
          _
      $region40: #{minibatch_gcn_train_forward.1} parent=5 // pred_fallthru
        _
      %p385 = scmp.le.s32.totalorder 1, %s25
      %p386 = scmp.lt.s32.totalorder %s25, 3
      %p387 = pnand %p385, %p386
      %p388 = pneg %p387
      // Predicated region
      $region53: #{minibatch_gcn_train_forward.1} parent=5 // pred_check
        _
      $region54: #{minibatch_gcn_train_forward.1} parent=5 // pred_check_branch
        %390 = sbr.rel (%p387) target = $region56
      $region55: #{minibatch_gcn_train_forward.1} parent=5 // pred_region
        %s391 = ssub.s32 %s25, 1
        %s392 = sand.u32 %s38, 1
        %s393 = scalar_lea.sflag [#allocation3], %s392
        %s394 = sand.u32 %s38, 1
        %s395 = smul.addr %s394, 32
        %s396 = scalar_lea.vmem [#allocation2], %s395
        // Predicated region
        $region57: #{minibatch_gcn_train_forward.1} parent=55 // pred_check
          %p397 = pneg %p51
        $region58: #{minibatch_gcn_train_forward.1} parent=55 // pred_check_branch
          %399 = sbr.rel (%p397) target = $region60
        $region59: #{minibatch_gcn_train_forward.1} parent=55 // pred_region
          %400 = dma.done %s393, 512
        $region60: #{minibatch_gcn_train_forward.1} parent=55 // pred_fallthru
          _
        %s401 = sand.u32 %s30, 1
        %s402 = scalar_lea.sflag [#allocation5], %s401
        %s403 = sand.u32 %s64, 1
        %s404 = smul.addr %s403, 16
        %s405 = scalar_lea.vmem [#allocation4], %s404
        // Predicated region
        $region61: #{minibatch_gcn_train_forward.1} parent=55 // pred_check
          %p406 = pneg %p77
        $region62: #{minibatch_gcn_train_forward.1} parent=55 // pred_check_branch
          %408 = sbr.rel (%p406) target = $region64
        $region63: #{minibatch_gcn_train_forward.1} parent=55 // pred_region
          %409 = dma.done %s402, 256
        $region64: #{minibatch_gcn_train_forward.1} parent=55 // pred_fallthru
          _
        // Predicated region
        $region65: #{minibatch_gcn_train_forward.1} parent=55 // pred_check
          %p410 = pneg %p98
        $region66: #{minibatch_gcn_train_forward.1} parent=55 // pred_check_branch
          %412 = sbr.rel (%p410) target = $region68
        $region67: #{minibatch_gcn_train_forward.1} parent=55 // pred_region
          %413 = dma.done [#allocation5], 1024
        $region68: #{minibatch_gcn_train_forward.1} parent=55 // pred_fallthru
          _
        %s414 = sand.u32 %s30, 1
        %s415 = scalar_lea.sflag [#allocation8], %s414
        %s416 = sand.u32 %s132, 1
        %s417 = smul.addr %s416, 8
        %s418 = scalar_lea.vmem [#allocation7], %s417
        // Predicated region
        $region69: #{minibatch_gcn_train_forward.1} parent=55 // pred_check
          %p419 = pneg %p145
        $region70: #{minibatch_gcn_train_forward.1} parent=55 // pred_check_branch
          %421 = sbr.rel (%p419) target = $region72
        $region71: #{minibatch_gcn_train_forward.1} parent=55 // pred_region
          %422 = dma.done %s415, 128
        $region72: #{minibatch_gcn_train_forward.1} parent=55 // pred_fallthru
          _
        // Predicated region
        $region73: #{minibatch_gcn_train_forward.1} parent=55 // pred_check
          %p423 = pneg %p166
        $region74: #{minibatch_gcn_train_forward.1} parent=55 // pred_check_branch
          %425 = sbr.rel (%p423) target = $region76
        $region75: #{minibatch_gcn_train_forward.1} parent=55 // pred_region
          %426 = dma.done [#allocation8], 1024
        $region76: #{minibatch_gcn_train_forward.1} parent=55 // pred_fallthru
          _
        // Predicated region
        $region77: #{minibatch_gcn_train_forward.1} parent=55 // pred_check
          %p427 = pneg %p208
        $region78: #{minibatch_gcn_train_forward.1} parent=55 // pred_check_branch
          %429 = sbr.rel (%p427) target = $region80
        $region79: #{minibatch_gcn_train_forward.1} parent=55 // pred_region
          %430 = dma.done [#allocation11], 1024
        $region80: #{minibatch_gcn_train_forward.1} parent=55 // pred_fallthru
          _
        %s431 = sand.u32 %s38, 1
        %s432 = scalar_lea.sflag [#allocation3], %s431
        %s433 = sand.u32 %s38, 1
        %s434 = smul.addr %s433, 32
        %s435 = scalar_lea.vmem [#allocation2], %s434
        %p436 = pneg %p51
        %p437 = pneg %p48
        %s438 = sand.u32 %s30, 1
        %s439 = scalar_lea.sflag [#allocation5], %s438
        %s440 = sand.u32 %s64, 1
        %s441 = smul.addr %s440, 16
        %s442 = scalar_lea.vmem [#allocation4], %s441
        %p443 = pneg %p77
        %p444 = pneg %p74
        %p445 = pneg %p98
        %p446 = pneg %p95
        %p447 = pneg %p119
        %p448 = pneg %p116
        %s449 = sand.u32 %s30, 1
        %s450 = scalar_lea.sflag [#allocation8], %s449
        %s451 = sand.u32 %s132, 1
        %s452 = smul.addr %s451, 8
        %s453 = scalar_lea.vmem [#allocation7], %s452
        %p454 = pneg %p145
        %p455 = pneg %p142
        %p456 = pneg %p166
        %p457 = pneg %p163
        %p458 = pneg %p187
        %p459 = pneg %p184
        %p460 = pneg %p208
        %p461 = pneg %p205
        %p462 = pneg %p229
        %p463 = pneg %p226
        %p464 = pneg %p255
        %p465 = pneg %p252
        %p466 = scmp.lt.s32.totalorder %s30, 1
        %s467 = scalar_select %p466, %s30, 1
        %s468 = smul.addr %s467, 2
        %s469 = smul.addr %s468, 8
        %s470 = scalar_lea.vmem %s9, %s469
        %p471 = scmp.lt.s32.totalorder %s30, 1
        %s472 = scalar_select %p471, %s30, 1
        %s473 = smul.addr %s472, 2
        %s474 = smul.addr %s473, 8
        %s475 = scalar_lea.vmem %s9, %s474
        %v477 = vld [vmem:[%s396] sm:$0xf]
        %v478 = vld [vmem:[%s396 + $0x4] sm:$0xf]
        %v479 = vld [vmem:[%s396 + $0x8] sm:$0xf]
        %v480 = vld [vmem:[%s396 + $0xc] sm:$0xf]
        %v481 = vld [vmem:[%s396 + $0x10] sm:$0xf]
        %v482 = vld [vmem:[%s396 + $0x14] sm:$0xf]
        %v483 = vld [vmem:[%s396 + $0x18] sm:$0xf]
        %v484 = vld [vmem:[%s396 + $0x1c] sm:$0xf]
        %v485 = vld [vmem:[%s405] sm:$0xf]
        %v486 = vld [vmem:[%s405 + $0x4] sm:$0xf]
        %v487 = vld [vmem:[%s405 + $0x8] sm:$0xf]
        %v488 = vld [vmem:[%s405 + $0xc] sm:$0xf]
        %v493 = vunpack.c.l.b16 %v485
        %v494 = vunpack.c.l.b16 %v486
        %v495 = vunpack.c.l.b16 %v487
        %v496 = vunpack.c.l.b16 %v488
        %v497 = vpack.c.b16 %v494, %v493
        %v498 = vpack.c.b16 %v496, %v495
        %v507 = vunpack.c.l.b16 %v477
        %v508 = vunpack.c.l.b16 %v478
        %v509 = vunpack.c.l.b16 %v479
        %v510 = vunpack.c.l.b16 %v480
        %v511 = vunpack.c.l.b16 %v481
        %v512 = vunpack.c.l.b16 %v482
        %v513 = vunpack.c.l.b16 %v483
        %v514 = vunpack.c.l.b16 %v484
        %v515 = vpack.c.b16 %v508, %v507
        %v516 = vpack.c.b16 %v510, %v509
        %v517 = vpack.c.b16 %v512, %v511
        %v518 = vpack.c.b16 %v514, %v513
        %vm523 = vcmask 523264
        %v525 = vsel %vm523, %v497, 0
        %v528 = vsel %vm523, %v498, 0
        %530 = vmatprep.subr.bf16.mxu0 0
        %531 = vmatpush1.bf16.msra.mxu0 %v515
        %532 = vmatprep.subr.bf16.mxu0 0
        %533 = vmatpush1.bf16.msra.mxu0 %v516
        %534 = vmatprep.subr.bf16.mxu0 0
        %535 = vmatpush1.bf16.msra.mxu0 %v517
        %536 = vmatprep.subr.bf16.mxu0 0
        %537 = vmatpush1.bf16.msra.mxu0 %v518
        %538 = vmatprep.subr.bf16.mxu0 0
        %539 = vmatpush1.bf16.msra.mxu0 0
        %540 = vmatprep.subr.bf16.mxu0 0
        %541 = vmatpush1.bf16.msra.mxu0 0
        %542 = vmatprep.subr.bf16.mxu0 0
        %543 = vmatpush1.bf16.msra.mxu0 0
        %544 = vmatprep.subr.bf16.mxu0 0
        %545 = vmatpush1.bf16.msra.mxu0 0
        %546 = vmatprep.subr.bf16.mxu0 0
        %547 = vmatpush1.bf16.msra.mxu0 0
        %548 = vmatprep.subr.bf16.mxu0 0
        %549 = vmatpush1.bf16.msra.mxu0 0
        %550 = vmatprep.subr.bf16.mxu0 0
        %551 = vmatpush1.bf16.msra.mxu0 0
        %552 = vmatprep.subr.bf16.mxu0 0
        %553 = vmatpush1.bf16.msra.mxu0 0
        %554 = vmatprep.subr.bf16.mxu0 0
        %555 = vmatpush1.bf16.msra.mxu0 0
        %556 = vmatprep.subr.bf16.mxu0 0
        %557 = vmatpush1.bf16.msra.mxu0 0
        %558 = vmatprep.subr.bf16.mxu0 0
        %559 = vmatpush1.bf16.msra.mxu0 0
        %560 = vmatprep.subr.bf16.mxu0 0
        %561 = vmatpush1.bf16.msra.mxu0 0
        %562 = vmatprep.mubr.bf16.mxu0 0
        %563 = vmatmul.mubr.bf16.gmra.mrb[0].mxu0 %v525
        %v564 = vpop.f32.mrb[0].mxu0
        %v565 = vadd.f32 0.0, %v564
        %v566 = vpop.f32.mrb[0].mxu0
        %v567 = vpop.f32.mrb[0].mxu0
        %v568 = vadd.f32 0.0, %v567
        %v569 = vpop.f32.mrb[0].mxu0
        %570 = vmatprep.mubr.bf16.mxu0 0
        %571 = vmatmul.mubr.bf16.gmra.mrb[0].mxu0 %v528
        %v572 = vpop.f32.mrb[0].mxu0
        %v573 = vadd.f32 0.0, %v572
        %v574 = vpop.f32.mrb[0].mxu0
        %v575 = vpop.f32.mrb[0].mxu0
        %v576 = vadd.f32 0.0, %v575
        %v577 = vpop.f32.mrb[0].mxu0
        %578 = vdwg.mxu0
        %v579 = vmul.f32 %v565, 0.25
        %v580 = vmul.f32 %v568, 0.25
        %v581 = vmul.f32 %v573, 0.25
        %v582 = vmul.f32 %v576, 0.25
        %v583 = vpack.c.bf16 %v580, %v579
        %v584 = vpack.c.bf16 %v582, %v581
        %v585 = vld [vmem:[#allocation6] sm:$0xf]
        %v586 = vld [vmem:[#allocation6 + $0x4] sm:$0xf]
        %v587 = vld [vmem:[#allocation6 + $0x8] sm:$0xf]
        %v588 = vld [vmem:[#allocation6 + $0xc] sm:$0xf]
        %v589 = vld [vmem:[#allocation6 + $0x10] sm:$0xf]
        %v590 = vld [vmem:[#allocation6 + $0x14] sm:$0xf]
        %v591 = vld [vmem:[#allocation6 + $0x18] sm:$0xf]
        %v592 = vld [vmem:[#allocation6 + $0x1c] sm:$0xf]
        %v593 = vld [vmem:[#allocation6 + $0x20] sm:$0xf]
        %v594 = vld [vmem:[#allocation6 + $0x24] sm:$0xf]
        %v595 = vld [vmem:[#allocation6 + $0x28] sm:$0xf]
        %v596 = vld [vmem:[#allocation6 + $0x2c] sm:$0xf]
        %v597 = vld [vmem:[#allocation6 + $0x30] sm:$0xf]
        %v598 = vld [vmem:[#allocation6 + $0x34] sm:$0xf]
        %v599 = vld [vmem:[#allocation6 + $0x38] sm:$0xf]
        %v600 = vld [vmem:[#allocation6 + $0x3c] sm:$0xf]
        %v601 = vld [vmem:[%s3] sm:$0x1]
        %v603 = vlaneseq
        %v604 = vshrl.u32 %v603, 7
        %v605 = vsub.s32 0, %v604
        %v606 = vrot.slane %v601, %v605
        %v624 = vunpack.c.l.b16 %v585
        %v625 = vunpack.c.l.b16 %v586
        %v626 = vunpack.c.l.b16 %v587
        %v627 = vunpack.c.l.b16 %v588
        %v628 = vunpack.c.l.b16 %v589
        %v629 = vunpack.c.l.b16 %v590
        %v630 = vunpack.c.l.b16 %v591
        %v631 = vunpack.c.l.b16 %v592
        %v632 = vunpack.c.l.b16 %v593
        %v633 = vunpack.c.l.b16 %v594
        %v634 = vunpack.c.l.b16 %v595
        %v635 = vunpack.c.l.b16 %v596
        %v636 = vunpack.c.l.b16 %v597
        %v637 = vunpack.c.l.b16 %v598
        %v638 = vunpack.c.l.b16 %v599
        %v639 = vunpack.c.l.b16 %v600
        %v640 = vpack.c.b16 %v625, %v624
        %v641 = vpack.c.b16 %v627, %v626
        %v642 = vpack.c.b16 %v629, %v628
        %v643 = vpack.c.b16 %v631, %v630
        %v644 = vpack.c.b16 %v633, %v632
        %v645 = vpack.c.b16 %v635, %v634
        %v646 = vpack.c.b16 %v637, %v636
        %v647 = vpack.c.b16 %v639, %v638
        %656 = vmatprep.subr.bf16.mxu0 0
        %657 = vmatpush1.bf16.msra.mxu0 %v640
        %658 = vmatprep.subr.bf16.mxu0 0
        %659 = vmatpush1.bf16.msra.mxu0 %v641
        %660 = vmatprep.subr.bf16.mxu0 0
        %661 = vmatpush1.bf16.msra.mxu0 %v642
        %662 = vmatprep.subr.bf16.mxu0 0
        %663 = vmatpush1.bf16.msra.mxu0 %v643
        %664 = vmatprep.subr.bf16.mxu0 0
        %665 = vmatpush1.bf16.msra.mxu0 %v644
        %666 = vmatprep.subr.bf16.mxu0 0
        %667 = vmatpush1.bf16.msra.mxu0 %v645
        %668 = vmatprep.subr.bf16.mxu0 0
        %669 = vmatpush1.bf16.msra.mxu0 %v646
        %670 = vmatprep.subr.bf16.mxu0 0
        %671 = vmatpush1.bf16.msra.mxu0 %v647
        %672 = vmatprep.subr.bf16.mxu0 0
        %673 = vmatpush1.bf16.msra.mxu0 0
        %674 = vmatprep.subr.bf16.mxu0 0
        %675 = vmatpush1.bf16.msra.mxu0 0
        %676 = vmatprep.subr.bf16.mxu0 0
        %677 = vmatpush1.bf16.msra.mxu0 0
        %678 = vmatprep.subr.bf16.mxu0 0
        %679 = vmatpush1.bf16.msra.mxu0 0
        %680 = vmatprep.subr.bf16.mxu0 0
        %681 = vmatpush1.bf16.msra.mxu0 0
        %682 = vmatprep.subr.bf16.mxu0 0
        %683 = vmatpush1.bf16.msra.mxu0 0
        %684 = vmatprep.subr.bf16.mxu0 0
        %685 = vmatpush1.bf16.msra.mxu0 0
        %686 = vmatprep.subr.bf16.mxu0 0
        %687 = vmatpush1.bf16.msra.mxu0 0
        %688 = vmatprep.mubr.bf16.mxu0 0
        %689 = vmatmul.mubr.bf16.gmra.mrb[0].mxu0 %v583
        %v690 = vpop.f32.mrb[0].mxu0
        %v691 = vadd.f32 %v606, %v690
        %v692 = vpop.f32.mrb[0].mxu0
        %v693 = vpop.f32.mrb[0].mxu0
        %v694 = vadd.f32 %v606, %v693
        %v695 = vpop.f32.mrb[0].mxu0
        %696 = vmatprep.mubr.bf16.mxu0 0
        %697 = vmatmul.mubr.bf16.gmra.mrb[0].mxu0 %v584
        %v698 = vpop.f32.mrb[0].mxu0
        %v699 = vadd.f32 %v606, %v698
        %v700 = vpop.f32.mrb[0].mxu0
        %v701 = vpop.f32.mrb[0].mxu0
        %v702 = vadd.f32 %v606, %v701
        %v703 = vpop.f32.mrb[0].mxu0
        %704 = vdwg.mxu0
        %v705 = vmax.f32 %v691, 0.0
        %v706 = vmax.f32 %v694, 0.0
        %v707 = vmax.f32 %v699, 0.0
        %v708 = vmax.f32 %v702, 0.0
        %v709 = vpack.c.bf16 %v706, %v705
        %v710 = vpack.c.bf16 %v708, %v707
        %v711 = vld [vmem:[%s418] sm:$0xf]
        %v712 = vld [vmem:[%s418 + $0x4] sm:$0xf]
        %v715 = vunpack.c.l.b16 %v711
        %v716 = vunpack.c.l.b16 %v712
        %v717 = vpack.c.b16 %v716, %v715
        %vm718 = vcmask 261120
        %v720 = vsel %vm718, %v717, 0
        %722 = vmatprep.subr.bf16.mxu0 0
        %723 = vmatpush1.bf16.msra.mxu0 %v709
        %724 = vmatprep.subr.bf16.mxu0 0
        %725 = vmatpush1.bf16.msra.mxu0 %v710
        %726 = vmatprep.subr.bf16.mxu0 0
        %727 = vmatpush1.bf16.msra.mxu0 0
        %728 = vmatprep.subr.bf16.mxu0 0
        %729 = vmatpush1.bf16.msra.mxu0 0
        %730 = vmatprep.subr.bf16.mxu0 0
        %731 = vmatpush1.bf16.msra.mxu0 0
        %732 = vmatprep.subr.bf16.mxu0 0
        %733 = vmatpush1.bf16.msra.mxu0 0
        %734 = vmatprep.subr.bf16.mxu0 0
        %735 = vmatpush1.bf16.msra.mxu0 0
        %736 = vmatprep.subr.bf16.mxu0 0
        %737 = vmatpush1.bf16.msra.mxu0 0
        %738 = vmatprep.subr.bf16.mxu0 0
        %739 = vmatpush1.bf16.msra.mxu0 0
        %740 = vmatprep.subr.bf16.mxu0 0
        %741 = vmatpush1.bf16.msra.mxu0 0
        %742 = vmatprep.subr.bf16.mxu0 0
        %743 = vmatpush1.bf16.msra.mxu0 0
        %744 = vmatprep.subr.bf16.mxu0 0
        %745 = vmatpush1.bf16.msra.mxu0 0
        %746 = vmatprep.subr.bf16.mxu0 0
        %747 = vmatpush1.bf16.msra.mxu0 0
        %748 = vmatprep.subr.bf16.mxu0 0
        %749 = vmatpush1.bf16.msra.mxu0 0
        %750 = vmatprep.subr.bf16.mxu0 0
        %751 = vmatpush1.bf16.msra.mxu0 0
        %752 = vmatprep.subr.bf16.mxu0 0
        %753 = vmatpush1.bf16.msra.mxu0 0
        %754 = vmatprep.mubr.bf16.mxu0 0
        %755 = vmatmul.mubr.bf16.gmra.mrb[0].mxu0 %v720
        %v756 = vpop.f32.mrb[0].mxu0
        %v757 = vadd.f32 0.0, %v756
        %v758 = vpop.f32.mrb[0].mxu0
        %v759 = vpop.f32.mrb[0].mxu0
        %v760 = vadd.f32 0.0, %v759
        %v761 = vpop.f32.mrb[0].mxu0
        %762 = vdwg.mxu0
        %v763 = vmul.f32 %v757, 0.25
        %v764 = vmul.f32 %v760, 0.25
        %v765 = vpack.c.bf16 %v764, %v763
        %v766 = vld [vmem:[#allocation9] sm:$0xf]
        %v767 = vld [vmem:[#allocation9 + $0x4] sm:$0xf]
        %v768 = vld [vmem:[#allocation9 + $0x8] sm:$0xf]
        %v769 = vld [vmem:[#allocation9 + $0xc] sm:$0xf]
        %v770 = vld [vmem:[#allocation9 + $0x10] sm:$0xf]
        %v771 = vld [vmem:[#allocation9 + $0x14] sm:$0xf]
        %v772 = vld [vmem:[#allocation9 + $0x18] sm:$0xf]
        %v773 = vld [vmem:[#allocation9 + $0x1c] sm:$0xf]
        %v774 = vld [vmem:[#allocation9 + $0x20] sm:$0xf]
        %v775 = vld [vmem:[#allocation9 + $0x24] sm:$0xf]
        %v776 = vld [vmem:[#allocation9 + $0x28] sm:$0xf]
        %v777 = vld [vmem:[#allocation9 + $0x2c] sm:$0xf]
        %v778 = vld [vmem:[#allocation9 + $0x30] sm:$0xf]
        %v779 = vld [vmem:[#allocation9 + $0x34] sm:$0xf]
        %v780 = vld [vmem:[#allocation9 + $0x38] sm:$0xf]
        %v781 = vld [vmem:[#allocation9 + $0x3c] sm:$0xf]
        %v782 = vld [vmem:[%s6] sm:$0x1]
        %v784 = vlaneseq
        %v785 = vshrl.u32 %v784, 7
        %v786 = vsub.s32 0, %v785
        %v787 = vrot.slane %v782, %v786
        %v805 = vunpack.c.l.b16 %v766
        %v806 = vunpack.c.l.b16 %v767
        %v807 = vunpack.c.l.b16 %v768
        %v808 = vunpack.c.l.b16 %v769
        %v809 = vunpack.c.l.b16 %v770
        %v810 = vunpack.c.l.b16 %v771
        %v811 = vunpack.c.l.b16 %v772
        %v812 = vunpack.c.l.b16 %v773
        %v813 = vunpack.c.l.b16 %v774
        %v814 = vunpack.c.l.b16 %v775
        %v815 = vunpack.c.l.b16 %v776
        %v816 = vunpack.c.l.b16 %v777
        %v817 = vunpack.c.l.b16 %v778
        %v818 = vunpack.c.l.b16 %v779
        %v819 = vunpack.c.l.b16 %v780
        %v820 = vunpack.c.l.b16 %v781
        %v821 = vpack.c.b16 %v806, %v805
        %v822 = vpack.c.b16 %v808, %v807
        %v823 = vpack.c.b16 %v810, %v809
        %v824 = vpack.c.b16 %v812, %v811
        %v825 = vpack.c.b16 %v814, %v813
        %v826 = vpack.c.b16 %v816, %v815
        %v827 = vpack.c.b16 %v818, %v817
        %v828 = vpack.c.b16 %v820, %v819
        %837 = vmatprep.subr.bf16.mxu0 0
        %838 = vmatpush1.bf16.msra.mxu0 %v821
        %839 = vmatprep.subr.bf16.mxu0 0
        %840 = vmatpush1.bf16.msra.mxu0 %v822
        %841 = vmatprep.subr.bf16.mxu0 0
        %842 = vmatpush1.bf16.msra.mxu0 %v823
        %843 = vmatprep.subr.bf16.mxu0 0
        %844 = vmatpush1.bf16.msra.mxu0 %v824
        %845 = vmatprep.subr.bf16.mxu0 0
        %846 = vmatpush1.bf16.msra.mxu0 %v825
        %847 = vmatprep.subr.bf16.mxu0 0
        %848 = vmatpush1.bf16.msra.mxu0 %v826
        %849 = vmatprep.subr.bf16.mxu0 0
        %850 = vmatpush1.bf16.msra.mxu0 %v827
        %851 = vmatprep.subr.bf16.mxu0 0
        %852 = vmatpush1.bf16.msra.mxu0 %v828
        %853 = vmatprep.subr.bf16.mxu0 0
        %854 = vmatpush1.bf16.msra.mxu0 0
        %855 = vmatprep.subr.bf16.mxu0 0
        %856 = vmatpush1.bf16.msra.mxu0 0
        %857 = vmatprep.subr.bf16.mxu0 0
        %858 = vmatpush1.bf16.msra.mxu0 0
        %859 = vmatprep.subr.bf16.mxu0 0
        %860 = vmatpush1.bf16.msra.mxu0 0
        %861 = vmatprep.subr.bf16.mxu0 0
        %862 = vmatpush1.bf16.msra.mxu0 0
        %863 = vmatprep.subr.bf16.mxu0 0
        %864 = vmatpush1.bf16.msra.mxu0 0
        %865 = vmatprep.subr.bf16.mxu0 0
        %866 = vmatpush1.bf16.msra.mxu0 0
        %867 = vmatprep.subr.bf16.mxu0 0
        %868 = vmatpush1.bf16.msra.mxu0 0
        %869 = vmatprep.mubr.bf16.mxu0 0
        %870 = vmatmul.mubr.bf16.gmra.mrb[0].mxu0 %v765
        %v871 = vpop.f32.mrb[0].mxu0
        %v872 = vadd.f32 %v787, %v871
        %v873 = vpop.f32.mrb[0].mxu0
        %v874 = vpop.f32.mrb[0].mxu0
        %v875 = vadd.f32 %v787, %v874
        %v876 = vpop.f32.mrb[0].mxu0
        %877 = vdwg.mxu0
        %v878 = vlaneseq
        %v879 = vand.u32 %v878, 127
        %vm880 = vcmp.ge.s32.totalorder %v879, 64
        %v881 = vmax.f32 %v872, 0.0
        %v882 = vmax.f32 %v875, 0.0
        %v883 = vsel %vm880, %v881, %v872
        %v884 = vsel %vm880, %v882, %v875
        %v885 = vpack.c.bf16 %v884, %v883
        %v886 = vld [vmem:[#allocation10] sm:$0xf]
        %v887 = vld [vmem:[#allocation10 + $0x4] sm:$0xf]
        %v888 = vld [vmem:[#allocation10 + $0x8] sm:$0xf]
        %v889 = vld [vmem:[#allocation10 + $0xc] sm:$0xf]
        %v890 = vld [vmem:[#allocation10 + $0x10] sm:$0xf]
        %v891 = vld [vmem:[#allocation10 + $0x14] sm:$0xf]
        %v892 = vld [vmem:[#allocation10 + $0x18] sm:$0xf]
        %v893 = vld [vmem:[#allocation10 + $0x1c] sm:$0xf]
        %v894 = vld [vmem:[#allocation10 + $0x20] sm:$0xf]
        %v895 = vld [vmem:[#allocation10 + $0x24] sm:$0xf]
        %v896 = vld [vmem:[#allocation10 + $0x28] sm:$0xf]
        %v897 = vld [vmem:[#allocation10 + $0x2c] sm:$0xf]
        %v898 = vld [vmem:[#allocation10 + $0x30] sm:$0xf]
        %v899 = vld [vmem:[#allocation10 + $0x34] sm:$0xf]
        %v900 = vld [vmem:[#allocation10 + $0x38] sm:$0xf]
        %v901 = vld [vmem:[#allocation10 + $0x3c] sm:$0xf]
        %v902 = vld [vmem:[%s8] sm:$0x1]
        %v904 = vlaneseq
        %v905 = vshrl.u32 %v904, 7
        %v906 = vsub.s32 0, %v905
        %v907 = vrot.slane %v902, %v906
        %v925 = vunpack.c.l.b16 %v886
        %v926 = vunpack.c.l.b16 %v887
        %v927 = vunpack.c.l.b16 %v888
        %v928 = vunpack.c.l.b16 %v889
        %v929 = vunpack.c.l.b16 %v890
        %v930 = vunpack.c.l.b16 %v891
        %v931 = vunpack.c.l.b16 %v892
        %v932 = vunpack.c.l.b16 %v893
        %v933 = vunpack.c.l.b16 %v894
        %v934 = vunpack.c.l.b16 %v895
        %v935 = vunpack.c.l.b16 %v896
        %v936 = vunpack.c.l.b16 %v897
        %v937 = vunpack.c.l.b16 %v898
        %v938 = vunpack.c.l.b16 %v899
        %v939 = vunpack.c.l.b16 %v900
        %v940 = vunpack.c.l.b16 %v901
        %v941 = vpack.c.b16 %v926, %v925
        %v942 = vpack.c.b16 %v928, %v927
        %v943 = vpack.c.b16 %v930, %v929
        %v944 = vpack.c.b16 %v932, %v931
        %v945 = vpack.c.b16 %v934, %v933
        %v946 = vpack.c.b16 %v936, %v935
        %v947 = vpack.c.b16 %v938, %v937
        %v948 = vpack.c.b16 %v940, %v939
        %957 = vmatprep.subr.bf16.mxu0 0
        %958 = vmatpush1.bf16.msra.mxu0 %v941
        %959 = vmatprep.subr.bf16.mxu0 0
        %960 = vmatpush1.bf16.msra.mxu0 %v942
        %961 = vmatprep.subr.bf16.mxu0 0
        %962 = vmatpush1.bf16.msra.mxu0 %v943
        %963 = vmatprep.subr.bf16.mxu0 0
        %964 = vmatpush1.bf16.msra.mxu0 %v944
        %965 = vmatprep.subr.bf16.mxu0 0
        %966 = vmatpush1.bf16.msra.mxu0 %v945
        %967 = vmatprep.subr.bf16.mxu0 0
        %968 = vmatpush1.bf16.msra.mxu0 %v946
        %969 = vmatprep.subr.bf16.mxu0 0
        %970 = vmatpush1.bf16.msra.mxu0 %v947
        %971 = vmatprep.subr.bf16.mxu0 0
        %972 = vmatpush1.bf16.msra.mxu0 %v948
        %973 = vmatprep.subr.bf16.mxu0 0
        %974 = vmatpush1.bf16.msra.mxu0 0
        %975 = vmatprep.subr.bf16.mxu0 0
        %976 = vmatpush1.bf16.msra.mxu0 0
        %977 = vmatprep.subr.bf16.mxu0 0
        %978 = vmatpush1.bf16.msra.mxu0 0
        %979 = vmatprep.subr.bf16.mxu0 0
        %980 = vmatpush1.bf16.msra.mxu0 0
        %981 = vmatprep.subr.bf16.mxu0 0
        %982 = vmatpush1.bf16.msra.mxu0 0
        %983 = vmatprep.subr.bf16.mxu0 0
        %984 = vmatpush1.bf16.msra.mxu0 0
        %985 = vmatprep.subr.bf16.mxu0 0
        %986 = vmatpush1.bf16.msra.mxu0 0
        %987 = vmatprep.subr.bf16.mxu0 0
        %988 = vmatpush1.bf16.msra.mxu0 0
        %989 = vmatprep.mubr.bf16.mxu0 0
        %990 = vmatmul.mubr.bf16.gmra.mrb[0].mxu0 %v885
        %v991 = vpop.f32.mrb[0].mxu0
        %v992 = vadd.f32 %v907, %v991
        %v993 = vpop.f32.mrb[0].mxu0
        %v994 = vpop.f32.mrb[0].mxu0
        %v995 = vadd.f32 %v907, %v994
        %v996 = vpop.f32.mrb[0].mxu0
        %997 = vdwg.mxu0
        %998 = vst [vmem:[%s475] sm:$0xff] %v992
        %999 = vst [vmem:[%s475 + $0x8] sm:$0xff] %v995
        %p1000 = scmp.lt.s32.totalorder %s30, 1
        %s1001 = scalar_select %p1000, %s30, 1
        %s1002 = smul.addr %s1001, 2
        %s1003 = smul.addr %s1002, 8
        %s1004 = scalar_lea.vmem %s9, %s1003
        // Predicated region
        $region81: #{minibatch_gcn_train_forward.1} parent=55 // pred_check
          %p1005 = pneg %p252
        $region82: #{minibatch_gcn_train_forward.1} parent=55 // pred_check_branch
          %1007 = sbr.rel (%p1005) target = $region84
        $region83: #{minibatch_gcn_train_forward.1} parent=55 // pred_region
          _
        $region84: #{minibatch_gcn_train_forward.1} parent=55 // pred_fallthru
          _
      $region56: #{minibatch_gcn_train_forward.1} parent=5 // pred_fallthru
        _
      %p1008 = scmp.le.s32.totalorder 2, %s25
      // Predicated region
      $region85: #{minibatch_gcn_train_forward.1} parent=5 // pred_check
        %p1009 = pneg %p1008
      $region86: #{minibatch_gcn_train_forward.1} parent=5 // pred_check_branch
        %1011 = sbr.rel (%p1009) target = $region88
      $region87: #{minibatch_gcn_train_forward.1} parent=5 // pred_region
        %s1012 = ssub.s32 %s25, 2
        // Predicated region
        $region89: #{minibatch_gcn_train_forward.1} parent=87 // pred_check
          %p1013 = pneg %p258
        $region90: #{minibatch_gcn_train_forward.1} parent=87 // pred_check_branch
          %1015 = sbr.rel (%p1013) target = $region92
        $region91: #{minibatch_gcn_train_forward.1} parent=87 // pred_region
          %p1016 = scmp.lt.s32.totalorder %s31, 1
          %s1017 = scalar_select %p1016, %s31, 1
          %s1018 = smul.addr %s1017, 2
          %s1019 = smul.addr %s1018, 8
          %s1020 = scalar_lea.vmem %s9, %s1019
        $region92: #{minibatch_gcn_train_forward.1} parent=87 // pred_fallthru
          _
      $region88: #{minibatch_gcn_train_forward.1} parent=5 // pred_fallthru
        _
    $region6: #{minibatch_gcn_train_forward.1} parent=1 // loop_footer
      %s29 = sadd.s32 1, %s25
    $region7: #{minibatch_gcn_train_forward.1} parent=1 // loop_footer_branch
      %24 = sbr.rel target = $region3
    $region8: #{minibatch_gcn_train_forward.1} parent=1 // loop_exit
      _
    %1021 = vsyncpa [#allocation3], 1
    %s1022 = scalar_lea.sflag [#allocation3], 1
    %1023 = vsyncpa %s1022, 1
    %1024 = vsyncpa [#allocation5], 1
    %s1025 = scalar_lea.sflag [#allocation5], 1
    %1026 = vsyncpa %s1025, 1
    %1027 = vsyncpa [#allocation8], 1
    %s1028 = scalar_lea.sflag [#allocation8], 1
    %1029 = vsyncpa %s1028, 1
    %1030 = vsyncpa [#allocation11], 1

</llo_original>
